<compile_context>
chip_gen: v7x
topology: tpu7x:2x2x1
jax: 0.10.0
libtpu: 0.0.40
codegen_flags: <defaults>
</compile_context>

<pallas_src>
import functools

import jax
import jax.numpy as jnp
from jax.experimental import pallas as pl
from jax.experimental.pallas import tpu as pltpu


# ----------------------------- Pallas kernel ------------------------------ #
def _gcn_kernel(x_ref, adj_ref, p_ref, out_ref, *, n, fin, fout, group):
    """One grid step = `group` graphs.

    x_ref   : (group, N, Fin)        node features (f32)
    adj_ref : (group, N, N)          per-graph adjacency (f32)
    p_ref   : (Fin + N + 1, P)       packed params:
                                       rows [0:Fin,   :Fout] -> weight
                                       rows [Fin:Fin+N, :N ] -> attention
                                       row  [Fin+N,   :Fout] -> bias
    out_ref : (1, N, group*Fout)     graph g occupies lanes [g*Fout, (g+1)*Fout)
    """
    # dropout: identity (inference).
    # TODO(synk): training-mode dropout not implemented (would need pltpu.prng_*).
    w_bf16 = p_ref[0:fin, 0:fout].astype(jnp.bfloat16)          # (Fin, Fout)
    att = p_ref[fin:fin + n, 0:n]                                # (N, N)  f32
    bias = p_ref[fin + n:fin + n + 1, 0:fout]                    # (1, Fout) f32

    outs = []
    for g in range(group):                                       # static unroll
        gated = att * adj_ref[g]                                 # (N, N) gate in f32 (v5e-safe)
        # Reordered contraction: (att*adj) @ x first (Fin < Fout).
        ax = jnp.dot(gated.astype(jnp.bfloat16),
                     x_ref[g].astype(jnp.bfloat16),
                     preferred_element_type=jnp.float32)         # (N, Fin)  MXU
        og = jnp.dot(ax.astype(jnp.bfloat16), w_bf16,
                     preferred_element_type=jnp.float32)         # (N, Fout) MXU
        outs.append(og + bias)                                   # bias add in f32
    # Single lane-dense (N, group*Fout) store.
    out_ref[0] = jnp.concatenate(outs, axis=-1).astype(out_ref.dtype)


# ------------------------------- wrapper ---------------------------------- #
def graph_convolution(x, weight, adj, attention, bias):
    """Batched GCN layer.

    x: (B, N, Fin), adj: (B, N, N), weight: (Fin, Fout), attention: (N, N),
    bias: (Fout,).  Returns (B, N, Fout) float32.  The module's native
    single-graph signature corresponds to B == 1 (batch is padded internally).
    """
    B, N, Fin = x.shape
    Fout = weight.shape[1]
    assert adj.shape == (B, N, N)
    assert attention.shape == (N, N)

    # Graphs packed per grid step so each output tile is lane-dense (group*Fout >= 128).
    group = max(1, 128 // Fout)
    Bp = ((B + group - 1) // group) * group
    if Bp != B:  # pad batch up to a multiple of `group` (sliced away at the end)
        x = jnp.concatenate([x, jnp.zeros((Bp - B, N, Fin), x.dtype)], axis=0)
        adj = jnp.concatenate([adj, jnp.zeros((Bp - B, N, N), adj.dtype)], axis=0)
    x = x.astype(jnp.float32)
    adj = adj.astype(jnp.float32)

    # Pack all static params into one contiguous buffer -> single parameter DMA,
    # issued once per call (constant index_map across the batch grid).
    P = max(Fout, N)
    params = jnp.zeros((Fin + N + 1, P), jnp.float32)
    params = params.at[:Fin, :Fout].set(weight.astype(jnp.float32))
    params = params.at[Fin:Fin + N, :N].set(attention.astype(jnp.float32))
    params = params.at[Fin + N, :Fout].set(bias.astype(jnp.float32))

    n_steps = Bp // group
    flops_per_graph = N * N + 2 * N * N * Fin + 2 * N * Fin * Fout + N * Fout
    bytes_accessed = 4 * (Bp * N * Fin + Bp * N * N + params.size + Bp * N * Fout)

    kernel = functools.partial(_gcn_kernel, n=N, fin=Fin, fout=Fout, group=group)
    out_packed = pl.pallas_call(
        kernel,
        out_shape=jax.ShapeDtypeStruct((n_steps, N, group * Fout), jnp.float32),
        grid=(n_steps,),
        in_specs=[
            pl.BlockSpec((group, N, Fin), lambda b: (b, 0, 0)),
            pl.BlockSpec((group, N, N), lambda b: (b, 0, 0)),
            pl.BlockSpec((Fin + N + 1, P), lambda b: (0, 0)),   # params: DMA'd once
        ],
        out_specs=pl.BlockSpec((1, N, group * Fout), lambda b: (b, 0, 0)),
        compiler_params=pltpu.CompilerParams(
            dimension_semantics=("parallel",)),   # batch sharded over v7x's 2 TCs
        cost_estimate=pl.CostEstimate(
            flops=Bp * flops_per_graph, transcendentals=0,
            bytes_accessed=bytes_accessed),
    )(x, adj, params)

    # Layout plumbing only: (n_steps, N, group*Fout) -> (B, N, Fout).
    out = (out_packed.reshape(n_steps, N, group, Fout)
           .transpose(0, 2, 1, 3)
           .reshape(Bp, N, Fout))
    return out[:B]


# ------------------------- parameter construction -------------------------- #
def _xavier_uniform(key, shape):
    fan_in, fan_out = shape
    bound = (6.0 / (fan_in + fan_out)) ** 0.5
    return jax.random.uniform(key, shape, jnp.float32, -bound, bound)


# ------------------------------ JAX references ----------------------------- #
def reference_forward_f32(x, weight, adj, attention, bias):
    support = jnp.einsum('bnf,fo->bno', x, weight)
    return jnp.einsum('bnm,bmo->bno', attention[None, :, :] * adj, support) + bias[None, None, :]


def reference_forward_bf16_matched(x, weight, adj, attention, bias):
    # Same math as the kernel (f32 gate, bf16 MXU inputs, f32 accumulation).
    gated = (attention[None, :, :] * adj).astype(jnp.bfloat16)
    ax = jnp.einsum('bnm,bmf->bnf', gated, x.astype(jnp.bfloat16),
                    preferred_element_type=jnp.float32)
    out = jnp.einsum('bnf,fo->bno', ax.astype(jnp.bfloat16),
                     weight.astype(jnp.bfloat16),
                     preferred_element_type=jnp.float32)
    return out + bias[None, None, :]


# ----------------------------------- main ----------------------------------- #
if __name__ == "__main__":
    # GraphConvolution(in_features=16, out_features=32); attention is 12x12 so N=12.
    # Batch of 8 graphs (4 graphs packed per grid step -> grid of 2 parallel steps).
    B, N, Fin, Fout = 8, 12, 16, 32

    key = jax.random.PRNGKey(0)
    kx, kw, ka, kadj, kb = jax.random.split(key, 5)

    x = jax.random.normal(kx, (B, N, Fin), jnp.float32)
    weight = _xavier_uniform(kw, (Fin, Fout))
    attention = _xavier_uniform(ka, (N, N))
    # module initializes bias to zeros; use a small random bias to exercise the add path
    bias = jax.random.uniform(kb, (Fout,), jnp.float32, -0.1, 0.1)

    # deterministic synthetic adjacency per graph: self-loops + random edges, row-normalized
    adj_raw = (jax.random.uniform(kadj, (B, N, N)) > 0.5).astype(jnp.float32)
    adj = adj_raw + jnp.eye(N, dtype=jnp.float32)[None, :, :]
    adj = adj / jnp.sum(adj, axis=-1, keepdims=True)

    out = graph_convolution(x, weight, adj, attention, bias)
    out = jax.block_until_ready(out)
    assert out.shape == (B, N, Fout)

    ref_matched = reference_forward_bf16_matched(x, weight, adj, attention, bias)
    ref_f32 = reference_forward_f32(x, weight, adj, attention, bias)
    assert jnp.allclose(out, ref_matched, atol=1e-3, rtol=1e-3), \
        "mismatch vs bf16-matched JAX reference"
    assert jnp.allclose(out, ref_f32, atol=3e-2, rtol=3e-2), \
        "mismatch vs f32 JAX reference (beyond bf16 tolerance)"

    # Single-graph call (the module's native signature); also exercises batch padding.
    out1 = graph_convolution(x[:1], weight, adj[:1], attention, bias)
    out1 = jax.block_until_ready(out1)
    assert jnp.allclose(out1, out[:1], atol=1e-6, rtol=1e-6), "single-graph path mismatch"

    print("KERNEL_OK")
</pallas_src>

<mosaic_0001>
module attributes {stable_mosaic.version = 11 : i64} {
  func.func @_gcn_kernel(%arg0: i32, %arg1: memref<4x12x16xf32, #tpu.memory_space<vmem>>, %arg2: memref<4x12x12xf32, #tpu.memory_space<vmem>>, %arg3: memref<29x32xf32, #tpu.memory_space<vmem>>, %arg4: memref<1x12x128xf32, #tpu.memory_space<vmem>>) attributes {dimension_semantics = [#tpu.dimension_semantics<parallel>], iteration_bounds = array<i64: 2>, scalar_prefetch = 0 : i64, scratch_operands = 0 : i64, tpu.core_type = #tpu.core_type<tc>, window_params = [{transform_indices = @transform_0, window_bounds = array<i64: 4, 12, 16>}, {transform_indices = @transform_1, window_bounds = array<i64: 4, 12, 12>}, {pipeline_mode = #tpu.pipeline_mode<synchronous>, transform_indices = @transform_2, window_bounds = array<i64: 29, 32>}, {transform_indices = @transform_3, window_bounds = array<i64: 1, 12, 128>}]} {
    %c0 = arith.constant 0 : index
    %c0_0 = arith.constant 0 : index
    %0 = vector.load %arg3[%c0, %c0_0] : memref<29x32xf32, #tpu.memory_space<vmem>>, vector<16x32xf32>
    %1 = arith.truncf %0 : vector<16x32xf32> to vector<16x32xbf16>
    %c16 = arith.constant 16 : index
    %c0_1 = arith.constant 0 : index
    %2 = vector.load %arg3[%c16, %c0_1] : memref<29x32xf32, #tpu.memory_space<vmem>>, vector<12x12xf32>
    %c28 = arith.constant 28 : index
    %c0_2 = arith.constant 0 : index
    %3 = vector.load %arg3[%c28, %c0_2] : memref<29x32xf32, #tpu.memory_space<vmem>>, vector<1x32xf32>
    %c0_3 = arith.constant 0 : index
    %c0_4 = arith.constant 0 : index
    %c0_5 = arith.constant 0 : index
    %4 = vector.load %arg2[%c0_3, %c0_4, %c0_5] : memref<4x12x12xf32, #tpu.memory_space<vmem>>, vector<1x12x12xf32>
    %5 = vector.shape_cast %4 : vector<1x12x12xf32> to vector<12x12xf32>
    %6 = arith.mulf %2, %5 : vector<12x12xf32>
    %7 = arith.truncf %6 : vector<12x12xf32> to vector<12x12xbf16>
    %c0_6 = arith.constant 0 : index
    %c0_7 = arith.constant 0 : index
    %c0_8 = arith.constant 0 : index
    %8 = vector.load %arg1[%c0_6, %c0_7, %c0_8] : memref<4x12x16xf32, #tpu.memory_space<vmem>>, vector<1x12x16xf32>
    %9 = vector.shape_cast %8 : vector<1x12x16xf32> to vector<12x16xf32>
    %10 = arith.truncf %9 : vector<12x16xf32> to vector<12x16xbf16>
    %cst = arith.constant dense<0.000000e+00> : vector<12x16xf32>
    %11 = tpu.matmul %7, %10, %cst {dimension_numbers = #tpu.dot_dimension_numbers<[1], [0], [0], [1], [0, 0, 1, 1], [], []>} : vector<12x12xbf16>, vector<12x16xbf16>, vector<12x16xf32> -> vector<12x16xf32>
    %12 = arith.truncf %11 : vector<12x16xf32> to vector<12x16xbf16>
    %cst_9 = arith.constant dense<0.000000e+00> : vector<12x32xf32>
    %13 = tpu.matmul %12, %1, %cst_9 {dimension_numbers = #tpu.dot_dimension_numbers<[1], [0], [0], [1], [0, 0, 1, 1], [], []>} : vector<12x16xbf16>, vector<16x32xbf16>, vector<12x32xf32> -> vector<12x32xf32>
    %14 = vector.broadcast %3 : vector<1x32xf32> to vector<12x32xf32>
    %15 = arith.addf %13, %14 : vector<12x32xf32>
    %c1 = arith.constant 1 : index
    %c0_10 = arith.constant 0 : index
    %c0_11 = arith.constant 0 : index
    %16 = vector.load %arg2[%c1, %c0_10, %c0_11] : memref<4x12x12xf32, #tpu.memory_space<vmem>>, vector<1x12x12xf32>
    %17 = vector.shape_cast %16 : vector<1x12x12xf32> to vector<12x12xf32>
    %18 = arith.mulf %2, %17 : vector<12x12xf32>
    %19 = arith.truncf %18 : vector<12x12xf32> to vector<12x12xbf16>
    %c1_12 = arith.constant 1 : index
    %c0_13 = arith.constant 0 : index
    %c0_14 = arith.constant 0 : index
    %20 = vector.load %arg1[%c1_12, %c0_13, %c0_14] : memref<4x12x16xf32, #tpu.memory_space<vmem>>, vector<1x12x16xf32>
    %21 = vector.shape_cast %20 : vector<1x12x16xf32> to vector<12x16xf32>
    %22 = arith.truncf %21 : vector<12x16xf32> to vector<12x16xbf16>
    %cst_15 = arith.constant dense<0.000000e+00> : vector<12x16xf32>
    %23 = tpu.matmul %19, %22, %cst_15 {dimension_numbers = #tpu.dot_dimension_numbers<[1], [0], [0], [1], [0, 0, 1, 1], [], []>} : vector<12x12xbf16>, vector<12x16xbf16>, vector<12x16xf32> -> vector<12x16xf32>
    %24 = arith.truncf %23 : vector<12x16xf32> to vector<12x16xbf16>
    %cst_16 = arith.constant dense<0.000000e+00> : vector<12x32xf32>
    %25 = tpu.matmul %24, %1, %cst_16 {dimension_numbers = #tpu.dot_dimension_numbers<[1], [0], [0], [1], [0, 0, 1, 1], [], []>} : vector<12x16xbf16>, vector<16x32xbf16>, vector<12x32xf32> -> vector<12x32xf32>
    %26 = vector.broadcast %3 : vector<1x32xf32> to vector<12x32xf32>
    %27 = arith.addf %25, %26 : vector<12x32xf32>
    %c2 = arith.constant 2 : index
    %c0_17 = arith.constant 0 : index
    %c0_18 = arith.constant 0 : index
    %28 = vector.load %arg2[%c2, %c0_17, %c0_18] : memref<4x12x12xf32, #tpu.memory_space<vmem>>, vector<1x12x12xf32>
    %29 = vector.shape_cast %28 : vector<1x12x12xf32> to vector<12x12xf32>
    %30 = arith.mulf %2, %29 : vector<12x12xf32>
    %31 = arith.truncf %30 : vector<12x12xf32> to vector<12x12xbf16>
    %c2_19 = arith.constant 2 : index
    %c0_20 = arith.constant 0 : index
    %c0_21 = arith.constant 0 : index
    %32 = vector.load %arg1[%c2_19, %c0_20, %c0_21] : memref<4x12x16xf32, #tpu.memory_space<vmem>>, vector<1x12x16xf32>
    %33 = vector.shape_cast %32 : vector<1x12x16xf32> to vector<12x16xf32>
    %34 = arith.truncf %33 : vector<12x16xf32> to vector<12x16xbf16>
    %cst_22 = arith.constant dense<0.000000e+00> : vector<12x16xf32>
    %35 = tpu.matmul %31, %34, %cst_22 {dimension_numbers = #tpu.dot_dimension_numbers<[1], [0], [0], [1], [0, 0, 1, 1], [], []>} : vector<12x12xbf16>, vector<12x16xbf16>, vector<12x16xf32> -> vector<12x16xf32>
    %36 = arith.truncf %35 : vector<12x16xf32> to vector<12x16xbf16>
    %cst_23 = arith.constant dense<0.000000e+00> : vector<12x32xf32>
    %37 = tpu.matmul %36, %1, %cst_23 {dimension_numbers = #tpu.dot_dimension_numbers<[1], [0], [0], [1], [0, 0, 1, 1], [], []>} : vector<12x16xbf16>, vector<16x32xbf16>, vector<12x32xf32> -> vector<12x32xf32>
    %38 = vector.broadcast %3 : vector<1x32xf32> to vector<12x32xf32>
    %39 = arith.addf %37, %38 : vector<12x32xf32>
    %c3 = arith.constant 3 : index
    %c0_24 = arith.constant 0 : index
    %c0_25 = arith.constant 0 : index
    %40 = vector.load %arg2[%c3, %c0_24, %c0_25] : memref<4x12x12xf32, #tpu.memory_space<vmem>>, vector<1x12x12xf32>
    %41 = vector.shape_cast %40 : vector<1x12x12xf32> to vector<12x12xf32>
    %42 = arith.mulf %2, %41 : vector<12x12xf32>
    %43 = arith.truncf %42 : vector<12x12xf32> to vector<12x12xbf16>
    %c3_26 = arith.constant 3 : index
    %c0_27 = arith.constant 0 : index
    %c0_28 = arith.constant 0 : index
    %44 = vector.load %arg1[%c3_26, %c0_27, %c0_28] : memref<4x12x16xf32, #tpu.memory_space<vmem>>, vector<1x12x16xf32>
    %45 = vector.shape_cast %44 : vector<1x12x16xf32> to vector<12x16xf32>
    %46 = arith.truncf %45 : vector<12x16xf32> to vector<12x16xbf16>
    %cst_29 = arith.constant dense<0.000000e+00> : vector<12x16xf32>
    %47 = tpu.matmul %43, %46, %cst_29 {dimension_numbers = #tpu.dot_dimension_numbers<[1], [0], [0], [1], [0, 0, 1, 1], [], []>} : vector<12x12xbf16>, vector<12x16xbf16>, vector<12x16xf32> -> vector<12x16xf32>
    %48 = arith.truncf %47 : vector<12x16xf32> to vector<12x16xbf16>
    %cst_30 = arith.constant dense<0.000000e+00> : vector<12x32xf32>
    %49 = tpu.matmul %48, %1, %cst_30 {dimension_numbers = #tpu.dot_dimension_numbers<[1], [0], [0], [1], [0, 0, 1, 1], [], []>} : vector<12x16xbf16>, vector<16x32xbf16>, vector<12x32xf32> -> vector<12x32xf32>
    %50 = vector.broadcast %3 : vector<1x32xf32> to vector<12x32xf32>
    %51 = arith.addf %49, %50 : vector<12x32xf32>
    %52 = tpu.concatenate %15, %27, %39, %51 in 1 : vector<12x32xf32>, vector<12x32xf32>, vector<12x32xf32>, vector<12x32xf32> -> vector<12x128xf32>
    %c0_31 = arith.constant 0 : index
    %c0_32 = arith.constant 0 : index
    %c0_33 = arith.constant 0 : index
    %53 = vector.load %arg4[%c0_31, %c0_32, %c0_33] : memref<1x12x128xf32, #tpu.memory_space<vmem>>, vector<1x12x128xf32>
    %54 = vector.shape_cast %53 : vector<1x12x128xf32> to vector<12x128xf32>
    %55 = vector.shape_cast %52 : vector<12x128xf32> to vector<1x12x128xf32>
    tpu.vector_store %arg4[%c0_31, %c0_32, %c0_33], %55 {strides = array<i32>} : memref<1x12x128xf32, #tpu.memory_space<vmem>>, vector<1x12x128xf32>,
    return
  }
  func.func @transform_0(%arg0: i32) -> (i32, i32, i32) {
    %c0_i32 = arith.constant 0 : i32
    %c0_i32_0 = arith.constant 0 : i32
    %c0_i32_1 = arith.constant 0 : i32
    return %arg0, %c0_i32, %c0_i32_0 : i32, i32, i32
  }
  func.func @transform_1(%arg0: i32) -> (i32, i32, i32) {
    %c0_i32 = arith.constant 0 : i32
    %c0_i32_0 = arith.constant 0 : i32
    %c0_i32_1 = arith.constant 0 : i32
    return %arg0, %c0_i32, %c0_i32_0 : i32, i32, i32
  }
  func.func @transform_2(%arg0: i32) -> (i32, i32) {
    %c0_i32 = arith.constant 0 : i32
    %c0_i32_0 = arith.constant 0 : i32
    %c0_i32_1 = arith.constant 0 : i32
    return %c0_i32, %c0_i32_0 : i32, i32
  }
  func.func @transform_3(%arg0: i32) -> (i32, i32, i32) {
    %c0_i32 = arith.constant 0 : i32
    %c0_i32_0 = arith.constant 0 : i32
    %c0_i32_1 = arith.constant 0 : i32
    return %arg0, %c0_i32, %c0_i32_0 : i32, i32, i32
  }
}

</mosaic_0001>

<llo_original>
// kernel: tpu_custom_call.1
$region0: #{tpu_custom_call.1}
  #allocation0 [shape = 'u32[]', space=smem, size = 0x4, offset = 0x4, fixed_abs, tag = 'smem constant byte address 0x4 - core index']
  #allocation1 [shape = 'u32[144,128]{1,0:T(1,128)}', space=vmem, size = 0x12000, scoped, tag = 'internal scratch']
  %s0 = inlined_call_operand.vmem [shape: f32[8,12,16], index: 0, kind: input, shape index: {}]
  %s1 = inlined_call_operand.vmem [shape: f32[8,12,12], index: 1, kind: input, shape index: {}]
  %s2 = inlined_call_operand.vmem [shape: f32[29,32], index: 2, kind: input, shape index: {}]
  %s3 = inlined_call_operand.vmem [shape: f32[2,12,128], index: 3, kind: output, shape index: {}]
  %s4 = sld [smem:[#allocation0]]
  $region45: #{tpu_custom_call.1} parent=0
    _
  %s6 = ssub.s32 1, %s4
  %s7 = scalar_select 0, %s6, %s4
  loop: start=0, step=1, limit=4
  $region2: #{tpu_custom_call.1} parent=0 // loop_pre_header
    _
  $region3: #{tpu_custom_call.1} parent=0 // loop_header
    %s9 = sphi 0, %s13
    %p10 = scmp.ge.s32.totalorder %s9, 4
    %s19 = sphi 0, %s21
    %s22 = sphi 0, %s19
    %s23 = sphi 0, %s22
    %s39 = sphi 0, %s23
    %s45 = sphi 0, %s47
    %s48 = sphi 0, %s45
    %s49 = sphi 0, %s48
    %s65 = sphi 0, %s49
    %s69 = sphi 0, %s69
    %s71 = sphi 0, %s69
    %s72 = sphi 0, %s71
    %s86 = sphi 0, %s72
    %s92 = sphi 0, %s94
    %s95 = sphi 0, %s92
    %s96 = sphi 0, %s95
    %s112 = sphi 0, %s96
  $region4: #{tpu_custom_call.1} parent=0 // loop_header_branch
    %12 = sbr.rel (%p10) target = $region8
  $region5: #{tpu_custom_call.1} parent=0 // loop_body
    %s14 = ssub.s32 %s9, 1
    %s15 = ssub.s32 %s9, 2
    %s16 = sadd.s32 %s9, 1
    %s17 = ssub.s32 %s9, %s16
    %p18 = scmp.eq.s32.totalorder %s17, 0
    %s20 = sadd.s32 %s19, 1
    %s21 = scalar_select %p18, %s19, %s20
    %p24 = pneg %p18
    %p25 = scmp.eq.s32.totalorder %s9, 1
    %p26 = por %p24, %p25
    %p27 = scmp.ne.s32.totalorder %s19, %s22
    %p28 = scmp.eq.s32.totalorder %s9, 0
    %p29 = por %p27, %p28
    %p30 = scmp.ne.s32.totalorder %s19, %s22
    %p31 = scmp.eq.s32.totalorder %s14, 1
    %p32 = por %p30, %p31
    %p33 = scmp.ne.s32.totalorder %s22, %s23
    %p34 = scmp.eq.s32.totalorder %s14, 0
    %p35 = por %p33, %p34
    %p36 = scmp.ne.s32.totalorder %s22, %s23
    %p37 = scmp.eq.s32.totalorder %s15, 1
    %p38 = por %p36, %p37
    %p40 = scmp.ne.s32.totalorder %s23, %s39
    %p41 = scmp.eq.s32.totalorder %s15, 0
    %p42 = por %p40, %p41
    %s43 = ssub.s32 %s9, %s16
    %p44 = scmp.eq.s32.totalorder %s43, 0
    %s46 = sadd.s32 %s45, 1
    %s47 = scalar_select %p44, %s45, %s46
    %p50 = pneg %p44
    %p51 = scmp.eq.s32.totalorder %s9, 1
    %p52 = por %p50, %p51
    %p53 = scmp.ne.s32.totalorder %s45, %s48
    %p54 = scmp.eq.s32.totalorder %s9, 0
    %p55 = por %p53, %p54
    %p56 = scmp.ne.s32.totalorder %s45, %s48
    %p57 = scmp.eq.s32.totalorder %s14, 1
    %p58 = por %p56, %p57
    %p59 = scmp.ne.s32.totalorder %s48, %s49
    %p60 = scmp.eq.s32.totalorder %s14, 0
    %p61 = por %p59, %p60
    %p62 = scmp.ne.s32.totalorder %s48, %s49
    %p63 = scmp.eq.s32.totalorder %s15, 1
    %p64 = por %p62, %p63
    %p66 = scmp.ne.s32.totalorder %s49, %s65
    %p67 = scmp.eq.s32.totalorder %s15, 0
    %p68 = por %p66, %p67
    %s70 = sadd.s32 %s69, 1
    %p73 = scmp.eq.s32.totalorder %s9, 1
    %p74 = scmp.ne.s32.totalorder %s69, %s71
    %p75 = scmp.eq.s32.totalorder %s9, 0
    %p76 = por %p74, %p75
    %p77 = scmp.ne.s32.totalorder %s69, %s71
    %p78 = scmp.eq.s32.totalorder %s14, 1
    %p79 = por %p77, %p78
    %p80 = scmp.ne.s32.totalorder %s71, %s72
    %p81 = scmp.eq.s32.totalorder %s14, 0
    %p82 = por %p80, %p81
    %p83 = scmp.ne.s32.totalorder %s71, %s72
    %p84 = scmp.eq.s32.totalorder %s15, 1
    %p85 = por %p83, %p84
    %p87 = scmp.ne.s32.totalorder %s72, %s86
    %p88 = scmp.eq.s32.totalorder %s15, 0
    %p89 = por %p87, %p88
    %s90 = ssub.s32 %s9, %s16
    %p91 = scmp.eq.s32.totalorder %s90, 0
    %s93 = sadd.s32 %s92, 1
    %s94 = scalar_select %p91, %s92, %s93
    %p97 = pneg %p91
    %p98 = scmp.eq.s32.totalorder %s9, 1
    %p99 = por %p97, %p98
    %p100 = scmp.ne.s32.totalorder %s92, %s95
    %p101 = scmp.eq.s32.totalorder %s9, 0
    %p102 = por %p100, %p101
    %p103 = scmp.ne.s32.totalorder %s92, %s95
    %p104 = scmp.eq.s32.totalorder %s14, 1
    %p105 = por %p103, %p104
    %p106 = scmp.ne.s32.totalorder %s95, %s96
    %p107 = scmp.eq.s32.totalorder %s14, 0
    %p108 = por %p106, %p107
    %p109 = scmp.ne.s32.totalorder %s95, %s96
    %p110 = scmp.eq.s32.totalorder %s15, 1
    %p111 = por %p109, %p110
    %p113 = scmp.ne.s32.totalorder %s96, %s112
    %p114 = scmp.eq.s32.totalorder %s15, 0
    %p115 = por %p113, %p114
    %p116 = scmp.le.s32.totalorder 1, %s9
    %p117 = scmp.lt.s32.totalorder %s9, 3
    %p118 = pnand %p116, %p117
    %p119 = pneg %p118
    // Predicated region
    $region9: #{tpu_custom_call.1} parent=5 // pred_check
      _
    $region10: #{tpu_custom_call.1} parent=5 // pred_check_branch
      %121 = sbr.rel (%p118) target = $region12
    $region11: #{tpu_custom_call.1} parent=5 // pred_region
      %s122 = ssub.s32 %s9, 1
      // Predicated region
      $region13: #{tpu_custom_call.1} parent=11 // pred_check
        %p123 = pneg %p82
      $region14: #{tpu_custom_call.1} parent=11 // pred_check_branch
        %125 = sbr.rel (%p123) target = $region16
      $region15: #{tpu_custom_call.1} parent=11 // pred_region
        _
      $region16: #{tpu_custom_call.1} parent=11 // pred_fallthru
        _
    $region12: #{tpu_custom_call.1} parent=5 // pred_fallthru
      _
    %p126 = scmp.lt.s32.totalorder %s9, 2
    // Predicated region
    $region17: #{tpu_custom_call.1} parent=5 // pred_check
      %p127 = pneg %p126
    $region18: #{tpu_custom_call.1} parent=5 // pred_check_branch
      %129 = sbr.rel (%p127) target = $region20
    $region19: #{tpu_custom_call.1} parent=5 // pred_region
      // Predicated region
      $region21: #{tpu_custom_call.1} parent=19 // pred_check
        %p130 = pneg %p29
      $region22: #{tpu_custom_call.1} parent=19 // pred_check_branch
        %132 = sbr.rel (%p130) target = $region24
      $region23: #{tpu_custom_call.1} parent=19 // pred_region
        %s133 = smul.u32 4, %s9
        %p134 = scmp.lt.s32.totalorder %s133, 7
        %s135 = scalar_select %p134, %s133, 7
        %s136 = smul.addr %s135, 2
        %s137 = smul.addr %s136, 8
        %s138 = scalar_lea.vmem %s0, %s137
        %s139 = smul.u32 4, %s9
      $region24: #{tpu_custom_call.1} parent=19 // pred_fallthru
        _
      // Predicated region
      $region25: #{tpu_custom_call.1} parent=19 // pred_check
        %p140 = pneg %p55
      $region26: #{tpu_custom_call.1} parent=19 // pred_check_branch
        %142 = sbr.rel (%p140) target = $region28
      $region27: #{tpu_custom_call.1} parent=19 // pred_region
        %s143 = smul.u32 4, %s9
        %p144 = scmp.lt.s32.totalorder %s143, 7
        %s145 = scalar_select %p144, %s143, 7
        %s146 = smul.addr %s145, 2
        %s147 = smul.addr %s146, 8
        %s148 = scalar_lea.vmem %s1, %s147
        %s149 = smul.u32 4, %s9
      $region28: #{tpu_custom_call.1} parent=19 // pred_fallthru
        _
    $region20: #{tpu_custom_call.1} parent=5 // pred_fallthru
      _
    %p150 = scmp.le.s32.totalorder 1, %s9
    %p151 = scmp.lt.s32.totalorder %s9, 3
    %p152 = pnand %p150, %p151
    %p153 = pneg %p152
    // Predicated region
    $region29: #{tpu_custom_call.1} parent=5 // pred_check
      _
    $region30: #{tpu_custom_call.1} parent=5 // pred_check_branch
      %155 = sbr.rel (%p152) target = $region32
    $region31: #{tpu_custom_call.1} parent=5 // pred_region
      %s156 = ssub.s32 %s9, 1
      %s157 = smul.u32 4, %s14
      %p158 = scmp.lt.s32.totalorder %s157, 7
      %s159 = scalar_select %p158, %s157, 7
      %s160 = smul.addr %s159, 2
      %s161 = smul.addr %s160, 8
      %s162 = scalar_lea.vmem %s0, %s161
      %p163 = pneg %p35
      %p164 = pneg %p32
      %s165 = smul.u32 4, %s14
      %p166 = scmp.lt.s32.totalorder %s165, 7
      %s167 = scalar_select %p166, %s165, 7
      %s168 = smul.addr %s167, 2
      %s169 = smul.addr %s168, 8
      %s170 = scalar_lea.vmem %s1, %s169
      %p171 = pneg %p61
      %p172 = pneg %p58
      %p173 = pneg %p82
      %p174 = pneg %p79
      %p175 = pneg %p108
      %p176 = pneg %p105
      %p177 = scmp.lt.s32.totalorder %s14, 1
      %s178 = scalar_select %p177, %s14, 1
      %s179 = smul.addr %s178, 2
      %s180 = smul.addr %s179, 8
      %s181 = scalar_lea.vmem %s3, %s180
      %s182 = smul.u32 4, %s14
      %p183 = scmp.lt.s32.totalorder %s182, 7
      %s184 = scalar_select %p183, %s182, 7
      %s185 = smul.addr %s184, 2
      %s186 = smul.addr %s185, 8
      %s187 = scalar_lea.vmem %s0, %s186
      %s188 = smul.u32 4, %s14
      %s189 = smul.u32 4, %s14
      %p190 = scmp.lt.s32.totalorder %s189, 7
      %s191 = scalar_select %p190, %s189, 7
      %s192 = smul.addr %s191, 2
      %s193 = smul.addr %s192, 8
      %s194 = scalar_lea.vmem %s1, %s193
      %s195 = smul.u32 4, %s14
      %p196 = scmp.lt.s32.totalorder %s14, 1
      %s197 = scalar_select %p196, %s14, 1
      %s198 = smul.addr %s197, 2
      %s199 = smul.addr %s198, 8
      %s200 = scalar_lea.vmem %s3, %s199
      %v202 = vld [vmem:[%s2] sm:$0xff]
      %v203 = vld [vmem:[%s2 + $0x8] sm:$0xff]
      %v204 = vpack.c.bf16 %v203, %v202
      %v205 = vld [vmem:[%s2 + $0x10] sm:$0xff]
      %v206 = vld [vmem:[%s2 + $0x18] sm:$0xf]
      %v207 = vld [vmem:[%s2 + $0x1c] sm:$0x1]
      %v208 = vld [vmem:[%s194] sm:$0xff]
      %v209 = vld [vmem:[%s194 + $0x8] sm:$0xf]
      %v210 = vmul.f32 %v205, %v208
      %v211 = vmul.f32 %v206, %v209
      %v212 = vpack.c.bf16 %v211, %v210
      %v213 = vld [vmem:[%s187] sm:$0xff]
      %v214 = vld [vmem:[%s187 + $0x8] sm:$0xf]
      %v215 = vpack.c.bf16 %v214, %v213
      %vm216 = vcmask 97280
      %v218 = vsel %vm216, %v212, 0
      %vm220 = vcmask 1045504
      %v222 = vsel %vm220, %v215, 0
      %224 = vmatprep.subr.bf16.mxu0 0
      %225 = vmatpush1.bf16.msra.mxu0 %v222
      %226 = vmatprep.subr.bf16.mxu0 0
      %227 = vmatpush1.bf16.msra.mxu0 0
      %228 = vmatprep.subr.bf16.mxu0 0
      %229 = vmatpush1.bf16.msra.mxu0 0
      %230 = vmatprep.subr.bf16.mxu0 0
      %231 = vmatpush1.bf16.msra.mxu0 0
      %232 = vmatprep.subr.bf16.mxu0 0
      %233 = vmatpush1.bf16.msra.mxu0 0
      %234 = vmatprep.subr.bf16.mxu0 0
      %235 = vmatpush1.bf16.msra.mxu0 0
      %236 = vmatprep.subr.bf16.mxu0 0
      %237 = vmatpush1.bf16.msra.mxu0 0
      %238 = vmatprep.subr.bf16.mxu0 0
      %239 = vmatpush1.bf16.msra.mxu0 0
      %240 = vmatprep.subr.bf16.mxu0 0
      %241 = vmatpush1.bf16.msra.mxu0 0
      %242 = vmatprep.subr.bf16.mxu0 0
      %243 = vmatpush1.bf16.msra.mxu0 0
      %244 = vmatprep.subr.bf16.mxu0 0
      %245 = vmatpush1.bf16.msra.mxu0 0
      %246 = vmatprep.subr.bf16.mxu0 0
      %247 = vmatpush1.bf16.msra.mxu0 0
      %248 = vmatprep.subr.bf16.mxu0 0
      %249 = vmatpush1.bf16.msra.mxu0 0
      %250 = vmatprep.subr.bf16.mxu0 0
      %251 = vmatpush1.bf16.msra.mxu0 0
      %252 = vmatprep.subr.bf16.mxu0 0
      %253 = vmatpush1.bf16.msra.mxu0 0
      %254 = vmatprep.subr.bf16.mxu0 0
      %255 = vmatpush1.bf16.msra.mxu0 0
      %256 = vmatprep.mubr.bf16.mxu0 0
      %257 = vmatmul.mubr.bf16.gmra.mrb[0].mxu0 %v218
      %v258 = vpop.f32.mrb[0].mxu0
      %v259 = vadd.f32 0.0, %v258
      %v260 = vpop.f32.mrb[0].mxu0
      %v261 = vpop.f32.mrb[0].mxu0
      %v262 = vadd.f32 0.0, %v261
      %v263 = vpop.f32.mrb[0].mxu0
      %264 = vdwg.mxu0
      %v265 = vpack.c.bf16 %v262, %v259
      %v266 = vlaneseq
      %v267 = vshrl.u32 %v266, 7
      %v268 = vsub.s32 0, %v267
      %v269 = vrot.slane %v207, %v268
      %vm270 = vcmask 130048
      %v272 = vsel %vm270, %v265, 0
      %274 = vmatprep.subr.bf16.mxu0 0
      %275 = vmatpush1.bf16.msra.mxu0 %v204
      %276 = vmatprep.subr.bf16.mxu0 0
      %277 = vmatpush1.bf16.msra.mxu0 0
      %278 = vmatprep.subr.bf16.mxu0 0
      %279 = vmatpush1.bf16.msra.mxu0 0
      %280 = vmatprep.subr.bf16.mxu0 0
      %281 = vmatpush1.bf16.msra.mxu0 0
      %282 = vmatprep.subr.bf16.mxu0 0
      %283 = vmatpush1.bf16.msra.mxu0 0
      %284 = vmatprep.subr.bf16.mxu0 0
      %285 = vmatpush1.bf16.msra.mxu0 0
      %286 = vmatprep.subr.bf16.mxu0 0
      %287 = vmatpush1.bf16.msra.mxu0 0
      %288 = vmatprep.subr.bf16.mxu0 0
      %289 = vmatpush1.bf16.msra.mxu0 0
      %290 = vmatprep.subr.bf16.mxu0 0
      %291 = vmatpush1.bf16.msra.mxu0 0
      %292 = vmatprep.subr.bf16.mxu0 0
      %293 = vmatpush1.bf16.msra.mxu0 0
      %294 = vmatprep.subr.bf16.mxu0 0
      %295 = vmatpush1.bf16.msra.mxu0 0
      %296 = vmatprep.subr.bf16.mxu0 0
      %297 = vmatpush1.bf16.msra.mxu0 0
      %298 = vmatprep.subr.bf16.mxu0 0
      %299 = vmatpush1.bf16.msra.mxu0 0
      %300 = vmatprep.subr.bf16.mxu0 0
      %301 = vmatpush1.bf16.msra.mxu0 0
      %302 = vmatprep.subr.bf16.mxu0 0
      %303 = vmatpush1.bf16.msra.mxu0 0
      %304 = vmatprep.subr.bf16.mxu0 0
      %305 = vmatpush1.bf16.msra.mxu0 0
      %306 = vmatprep.mubr.bf16.mxu0 0
      %307 = vmatmul.mubr.bf16.gmra.mrb[0].mxu0 %v272
      %v308 = vpop.f32.mrb[0].mxu0
      %v309 = vadd.f32 %v269, %v308
      %v310 = vpop.f32.mrb[0].mxu0
      %v311 = vpop.f32.mrb[0].mxu0
      %v312 = vadd.f32 %v269, %v311
      %v313 = vpop.f32.mrb[0].mxu0
      %314 = vdwg.mxu0
      %s315 = scalar_lea.vmem %s194, 16
      %v316 = vld [vmem:[%s315] sm:$0xff]
      %v317 = vld [vmem:[%s315 + $0x8] sm:$0xf]
      %v318 = vmul.f32 %v205, %v316
      %v319 = vmul.f32 %v206, %v317
      %v320 = vpack.c.bf16 %v319, %v318
      %s321 = scalar_lea.vmem %s187, 16
      %v322 = vld [vmem:[%s321] sm:$0xff]
      %v323 = vld [vmem:[%s321 + $0x8] sm:$0xf]
      %v324 = vpack.c.bf16 %v323, %v322
      %v326 = vsel %vm216, %v320, 0
      %v329 = vsel %vm220, %v324, 0
      %331 = vmatprep.subr.bf16.mxu0 0
      %332 = vmatpush1.bf16.msra.mxu0 %v329
      %333 = vmatprep.subr.bf16.mxu0 0
      %334 = vmatpush1.bf16.msra.mxu0 0
      %335 = vmatprep.subr.bf16.mxu0 0
      %336 = vmatpush1.bf16.msra.mxu0 0
      %337 = vmatprep.subr.bf16.mxu0 0
      %338 = vmatpush1.bf16.msra.mxu0 0
      %339 = vmatprep.subr.bf16.mxu0 0
      %340 = vmatpush1.bf16.msra.mxu0 0
      %341 = vmatprep.subr.bf16.mxu0 0
      %342 = vmatpush1.bf16.msra.mxu0 0
      %343 = vmatprep.subr.bf16.mxu0 0
      %344 = vmatpush1.bf16.msra.mxu0 0
      %345 = vmatprep.subr.bf16.mxu0 0
      %346 = vmatpush1.bf16.msra.mxu0 0
      %347 = vmatprep.subr.bf16.mxu0 0
      %348 = vmatpush1.bf16.msra.mxu0 0
      %349 = vmatprep.subr.bf16.mxu0 0
      %350 = vmatpush1.bf16.msra.mxu0 0
      %351 = vmatprep.subr.bf16.mxu0 0
      %352 = vmatpush1.bf16.msra.mxu0 0
      %353 = vmatprep.subr.bf16.mxu0 0
      %354 = vmatpush1.bf16.msra.mxu0 0
      %355 = vmatprep.subr.bf16.mxu0 0
      %356 = vmatpush1.bf16.msra.mxu0 0
      %357 = vmatprep.subr.bf16.mxu0 0
      %358 = vmatpush1.bf16.msra.mxu0 0
      %359 = vmatprep.subr.bf16.mxu0 0
      %360 = vmatpush1.bf16.msra.mxu0 0
      %361 = vmatprep.subr.bf16.mxu0 0
      %362 = vmatpush1.bf16.msra.mxu0 0
      %363 = vmatprep.mubr.bf16.mxu0 0
      %364 = vmatmul.mubr.bf16.gmra.mrb[0].mxu0 %v326
      %v365 = vpop.f32.mrb[0].mxu0
      %v366 = vadd.f32 0.0, %v365
      %v367 = vpop.f32.mrb[0].mxu0
      %v368 = vpop.f32.mrb[0].mxu0
      %v369 = vadd.f32 0.0, %v368
      %v370 = vpop.f32.mrb[0].mxu0
      %371 = vdwg.mxu0
      %v372 = vpack.c.bf16 %v369, %v366
      %v374 = vsel %vm270, %v372, 0
      %376 = vmatprep.subr.bf16.mxu0 0
      %377 = vmatpush1.bf16.msra.mxu0 %v204
      %378 = vmatprep.subr.bf16.mxu0 0
      %379 = vmatpush1.bf16.msra.mxu0 0
      %380 = vmatprep.subr.bf16.mxu0 0
      %381 = vmatpush1.bf16.msra.mxu0 0
      %382 = vmatprep.subr.bf16.mxu0 0
      %383 = vmatpush1.bf16.msra.mxu0 0
      %384 = vmatprep.subr.bf16.mxu0 0
      %385 = vmatpush1.bf16.msra.mxu0 0
      %386 = vmatprep.subr.bf16.mxu0 0
      %387 = vmatpush1.bf16.msra.mxu0 0
      %388 = vmatprep.subr.bf16.mxu0 0
      %389 = vmatpush1.bf16.msra.mxu0 0
      %390 = vmatprep.subr.bf16.mxu0 0
      %391 = vmatpush1.bf16.msra.mxu0 0
      %392 = vmatprep.subr.bf16.mxu0 0
      %393 = vmatpush1.bf16.msra.mxu0 0
      %394 = vmatprep.subr.bf16.mxu0 0
      %395 = vmatpush1.bf16.msra.mxu0 0
      %396 = vmatprep.subr.bf16.mxu0 0
      %397 = vmatpush1.bf16.msra.mxu0 0
      %398 = vmatprep.subr.bf16.mxu0 0
      %399 = vmatpush1.bf16.msra.mxu0 0
      %400 = vmatprep.subr.bf16.mxu0 0
      %401 = vmatpush1.bf16.msra.mxu0 0
      %402 = vmatprep.subr.bf16.mxu0 0
      %403 = vmatpush1.bf16.msra.mxu0 0
      %404 = vmatprep.subr.bf16.mxu0 0
      %405 = vmatpush1.bf16.msra.mxu0 0
      %406 = vmatprep.subr.bf16.mxu0 0
      %407 = vmatpush1.bf16.msra.mxu0 0
      %408 = vmatprep.mubr.bf16.mxu0 0
      %409 = vmatmul.mubr.bf16.gmra.mrb[0].mxu0 %v374
      %v410 = vpop.f32.mrb[0].mxu0
      %v411 = vadd.f32 %v269, %v410
      %v412 = vpop.f32.mrb[0].mxu0
      %v413 = vpop.f32.mrb[0].mxu0
      %v414 = vadd.f32 %v269, %v413
      %v415 = vpop.f32.mrb[0].mxu0
      %416 = vdwg.mxu0
      %s417 = scalar_lea.vmem %s194, 32
      %v418 = vld [vmem:[%s417] sm:$0xff]
      %v419 = vld [vmem:[%s417 + $0x8] sm:$0xf]
      %v420 = vmul.f32 %v205, %v418
      %v421 = vmul.f32 %v206, %v419
      %v422 = vpack.c.bf16 %v421, %v420
      %s423 = scalar_lea.vmem %s187, 32
      %v424 = vld [vmem:[%s423] sm:$0xff]
      %v425 = vld [vmem:[%s423 + $0x8] sm:$0xf]
      %v426 = vpack.c.bf16 %v425, %v424
      %v428 = vsel %vm216, %v422, 0
      %v431 = vsel %vm220, %v426, 0
      %433 = vmatprep.subr.bf16.mxu0 0
      %434 = vmatpush1.bf16.msra.mxu0 %v431
      %435 = vmatprep.subr.bf16.mxu0 0
      %436 = vmatpush1.bf16.msra.mxu0 0
      %437 = vmatprep.subr.bf16.mxu0 0
      %438 = vmatpush1.bf16.msra.mxu0 0
      %439 = vmatprep.subr.bf16.mxu0 0
      %440 = vmatpush1.bf16.msra.mxu0 0
      %441 = vmatprep.subr.bf16.mxu0 0
      %442 = vmatpush1.bf16.msra.mxu0 0
      %443 = vmatprep.subr.bf16.mxu0 0
      %444 = vmatpush1.bf16.msra.mxu0 0
      %445 = vmatprep.subr.bf16.mxu0 0
      %446 = vmatpush1.bf16.msra.mxu0 0
      %447 = vmatprep.subr.bf16.mxu0 0
      %448 = vmatpush1.bf16.msra.mxu0 0
      %449 = vmatprep.subr.bf16.mxu0 0
      %450 = vmatpush1.bf16.msra.mxu0 0
      %451 = vmatprep.subr.bf16.mxu0 0
      %452 = vmatpush1.bf16.msra.mxu0 0
      %453 = vmatprep.subr.bf16.mxu0 0
      %454 = vmatpush1.bf16.msra.mxu0 0
      %455 = vmatprep.subr.bf16.mxu0 0
      %456 = vmatpush1.bf16.msra.mxu0 0
      %457 = vmatprep.subr.bf16.mxu0 0
      %458 = vmatpush1.bf16.msra.mxu0 0
      %459 = vmatprep.subr.bf16.mxu0 0
      %460 = vmatpush1.bf16.msra.mxu0 0
      %461 = vmatprep.subr.bf16.mxu0 0
      %462 = vmatpush1.bf16.msra.mxu0 0
      %463 = vmatprep.subr.bf16.mxu0 0
      %464 = vmatpush1.bf16.msra.mxu0 0
      %465 = vmatprep.mubr.bf16.mxu0 0
      %466 = vmatmul.mubr.bf16.gmra.mrb[0].mxu0 %v428
      %v467 = vpop.f32.mrb[0].mxu0
      %v468 = vadd.f32 0.0, %v467
      %v469 = vpop.f32.mrb[0].mxu0
      %v470 = vpop.f32.mrb[0].mxu0
      %v471 = vadd.f32 0.0, %v470
      %v472 = vpop.f32.mrb[0].mxu0
      %473 = vdwg.mxu0
      %v474 = vpack.c.bf16 %v471, %v468
      %v476 = vsel %vm270, %v474, 0
      %478 = vmatprep.subr.bf16.mxu0 0
      %479 = vmatpush1.bf16.msra.mxu0 %v204
      %480 = vmatprep.subr.bf16.mxu0 0
      %481 = vmatpush1.bf16.msra.mxu0 0
      %482 = vmatprep.subr.bf16.mxu0 0
      %483 = vmatpush1.bf16.msra.mxu0 0
      %484 = vmatprep.subr.bf16.mxu0 0
      %485 = vmatpush1.bf16.msra.mxu0 0
      %486 = vmatprep.subr.bf16.mxu0 0
      %487 = vmatpush1.bf16.msra.mxu0 0
      %488 = vmatprep.subr.bf16.mxu0 0
      %489 = vmatpush1.bf16.msra.mxu0 0
      %490 = vmatprep.subr.bf16.mxu0 0
      %491 = vmatpush1.bf16.msra.mxu0 0
      %492 = vmatprep.subr.bf16.mxu0 0
      %493 = vmatpush1.bf16.msra.mxu0 0
      %494 = vmatprep.subr.bf16.mxu0 0
      %495 = vmatpush1.bf16.msra.mxu0 0
      %496 = vmatprep.subr.bf16.mxu0 0
      %497 = vmatpush1.bf16.msra.mxu0 0
      %498 = vmatprep.subr.bf16.mxu0 0
      %499 = vmatpush1.bf16.msra.mxu0 0
      %500 = vmatprep.subr.bf16.mxu0 0
      %501 = vmatpush1.bf16.msra.mxu0 0
      %502 = vmatprep.subr.bf16.mxu0 0
      %503 = vmatpush1.bf16.msra.mxu0 0
      %504 = vmatprep.subr.bf16.mxu0 0
      %505 = vmatpush1.bf16.msra.mxu0 0
      %506 = vmatprep.subr.bf16.mxu0 0
      %507 = vmatpush1.bf16.msra.mxu0 0
      %508 = vmatprep.subr.bf16.mxu0 0
      %509 = vmatpush1.bf16.msra.mxu0 0
      %510 = vmatprep.mubr.bf16.mxu0 0
      %511 = vmatmul.mubr.bf16.gmra.mrb[0].mxu0 %v476
      %v512 = vpop.f32.mrb[0].mxu0
      %v513 = vadd.f32 %v269, %v512
      %v514 = vpop.f32.mrb[0].mxu0
      %v515 = vpop.f32.mrb[0].mxu0
      %v516 = vadd.f32 %v269, %v515
      %v517 = vpop.f32.mrb[0].mxu0
      %518 = vdwg.mxu0
      %s519 = scalar_lea.vmem %s194, 48
      %v520 = vld [vmem:[%s519] sm:$0xff]
      %v521 = vld [vmem:[%s519 + $0x8] sm:$0xf]
      %v522 = vmul.f32 %v205, %v520
      %v523 = vmul.f32 %v206, %v521
      %v524 = vpack.c.bf16 %v523, %v522
      %s525 = scalar_lea.vmem %s187, 48
      %v526 = vld [vmem:[%s525] sm:$0xff]
      %v527 = vld [vmem:[%s525 + $0x8] sm:$0xf]
      %v528 = vpack.c.bf16 %v527, %v526
      %v530 = vsel %vm216, %v524, 0
      %v533 = vsel %vm220, %v528, 0
      %535 = vmatprep.subr.bf16.mxu0 0
      %536 = vmatpush1.bf16.msra.mxu0 %v533
      %537 = vmatprep.subr.bf16.mxu0 0
      %538 = vmatpush1.bf16.msra.mxu0 0
      %539 = vmatprep.subr.bf16.mxu0 0
      %540 = vmatpush1.bf16.msra.mxu0 0
      %541 = vmatprep.subr.bf16.mxu0 0
      %542 = vmatpush1.bf16.msra.mxu0 0
      %543 = vmatprep.subr.bf16.mxu0 0
      %544 = vmatpush1.bf16.msra.mxu0 0
      %545 = vmatprep.subr.bf16.mxu0 0
      %546 = vmatpush1.bf16.msra.mxu0 0
      %547 = vmatprep.subr.bf16.mxu0 0
      %548 = vmatpush1.bf16.msra.mxu0 0
      %549 = vmatprep.subr.bf16.mxu0 0
      %550 = vmatpush1.bf16.msra.mxu0 0
      %551 = vmatprep.subr.bf16.mxu0 0
      %552 = vmatpush1.bf16.msra.mxu0 0
      %553 = vmatprep.subr.bf16.mxu0 0
      %554 = vmatpush1.bf16.msra.mxu0 0
      %555 = vmatprep.subr.bf16.mxu0 0
      %556 = vmatpush1.bf16.msra.mxu0 0
      %557 = vmatprep.subr.bf16.mxu0 0
      %558 = vmatpush1.bf16.msra.mxu0 0
      %559 = vmatprep.subr.bf16.mxu0 0
      %560 = vmatpush1.bf16.msra.mxu0 0
      %561 = vmatprep.subr.bf16.mxu0 0
      %562 = vmatpush1.bf16.msra.mxu0 0
      %563 = vmatprep.subr.bf16.mxu0 0
      %564 = vmatpush1.bf16.msra.mxu0 0
      %565 = vmatprep.subr.bf16.mxu0 0
      %566 = vmatpush1.bf16.msra.mxu0 0
      %567 = vmatprep.mubr.bf16.mxu0 0
      %568 = vmatmul.mubr.bf16.gmra.mrb[0].mxu0 %v530
      %v569 = vpop.f32.mrb[0].mxu0
      %v570 = vadd.f32 0.0, %v569
      %v571 = vpop.f32.mrb[0].mxu0
      %v572 = vpop.f32.mrb[0].mxu0
      %v573 = vadd.f32 0.0, %v572
      %v574 = vpop.f32.mrb[0].mxu0
      %575 = vdwg.mxu0
      %v576 = vpack.c.bf16 %v573, %v570
      %v578 = vsel %vm270, %v576, 0
      %580 = vmatprep.subr.bf16.mxu0 0
      %581 = vmatpush1.bf16.msra.mxu0 %v204
      %582 = vmatprep.subr.bf16.mxu0 0
      %583 = vmatpush1.bf16.msra.mxu0 0
      %584 = vmatprep.subr.bf16.mxu0 0
      %585 = vmatpush1.bf16.msra.mxu0 0
      %586 = vmatprep.subr.bf16.mxu0 0
      %587 = vmatpush1.bf16.msra.mxu0 0
      %588 = vmatprep.subr.bf16.mxu0 0
      %589 = vmatpush1.bf16.msra.mxu0 0
      %590 = vmatprep.subr.bf16.mxu0 0
      %591 = vmatpush1.bf16.msra.mxu0 0
      %592 = vmatprep.subr.bf16.mxu0 0
      %593 = vmatpush1.bf16.msra.mxu0 0
      %594 = vmatprep.subr.bf16.mxu0 0
      %595 = vmatpush1.bf16.msra.mxu0 0
      %596 = vmatprep.subr.bf16.mxu0 0
      %597 = vmatpush1.bf16.msra.mxu0 0
      %598 = vmatprep.subr.bf16.mxu0 0
      %599 = vmatpush1.bf16.msra.mxu0 0
      %600 = vmatprep.subr.bf16.mxu0 0
      %601 = vmatpush1.bf16.msra.mxu0 0
      %602 = vmatprep.subr.bf16.mxu0 0
      %603 = vmatpush1.bf16.msra.mxu0 0
      %604 = vmatprep.subr.bf16.mxu0 0
      %605 = vmatpush1.bf16.msra.mxu0 0
      %606 = vmatprep.subr.bf16.mxu0 0
      %607 = vmatpush1.bf16.msra.mxu0 0
      %608 = vmatprep.subr.bf16.mxu0 0
      %609 = vmatpush1.bf16.msra.mxu0 0
      %610 = vmatprep.subr.bf16.mxu0 0
      %611 = vmatpush1.bf16.msra.mxu0 0
      %612 = vmatprep.mubr.bf16.mxu0 0
      %613 = vmatmul.mubr.bf16.gmra.mrb[0].mxu0 %v578
      %v614 = vpop.f32.mrb[0].mxu0
      %v615 = vadd.f32 %v269, %v614
      %v616 = vpop.f32.mrb[0].mxu0
      %v617 = vpop.f32.mrb[0].mxu0
      %v618 = vadd.f32 %v269, %v617
      %v619 = vpop.f32.mrb[0].mxu0
      %620 = vdwg.mxu0
      %623 = vrot.lane.b32.xlu0 %v411, 32
      %v624 = vpop.permute.xlu0 %623
      %625 = vrot.lane.b32.xlu0 %v414, 32
      %v626 = vpop.permute.xlu0 %625
      %631 = vrot.lane.b32.xlu0 %v513, 64
      %v632 = vpop.permute.xlu0 %631
      %633 = vrot.lane.b32.xlu0 %v516, 64
      %v634 = vpop.permute.xlu0 %633
      %639 = vrot.lane.b32.xlu0 %v615, 96
      %v640 = vpop.permute.xlu0 %639
      %641 = vrot.lane.b32.xlu0 %v618, 96
      %v642 = vpop.permute.xlu0 %641
      %vm645 = vcmask 261120
      %v646 = vsel %vm645, %v309, %v624
      %v647 = vsel %vm645, %v312, %v626
      %vm648 = vcmask 523264
      %v649 = vsel %vm648, %v646, %v632
      %v650 = vsel %vm648, %v647, %v634
      %vm651 = vcmask 785408
      %v652 = vsel %vm651, %v649, %v640
      %v653 = vsel %vm651, %v650, %v642
      %654 = vst [vmem:[%s200] sm:$0xff] %v652
      %655 = vst [vmem:[%s200 + $0x8] sm:$0xf] %v653
      %p656 = scmp.lt.s32.totalorder %s14, 1
      %s657 = scalar_select %p656, %s14, 1
      %s658 = smul.addr %s657, 2
      %s659 = smul.addr %s658, 8
      %s660 = scalar_lea.vmem %s3, %s659
      // Predicated region
      $region33: #{tpu_custom_call.1} parent=31 // pred_check
        %p661 = pneg %p105
      $region34: #{tpu_custom_call.1} parent=31 // pred_check_branch
        %663 = sbr.rel (%p661) target = $region36
      $region35: #{tpu_custom_call.1} parent=31 // pred_region
        _
      $region36: #{tpu_custom_call.1} parent=31 // pred_fallthru
        _
    $region32: #{tpu_custom_call.1} parent=5 // pred_fallthru
      _
    %p664 = scmp.le.s32.totalorder 2, %s9
    // Predicated region
    $region37: #{tpu_custom_call.1} parent=5 // pred_check
      %p665 = pneg %p664
    $region38: #{tpu_custom_call.1} parent=5 // pred_check_branch
      %667 = sbr.rel (%p665) target = $region40
    $region39: #{tpu_custom_call.1} parent=5 // pred_region
      %s668 = ssub.s32 %s9, 2
      // Predicated region
      $region41: #{tpu_custom_call.1} parent=39 // pred_check
        %p669 = pneg %p111
      $region42: #{tpu_custom_call.1} parent=39 // pred_check_branch
        %671 = sbr.rel (%p669) target = $region44
      $region43: #{tpu_custom_call.1} parent=39 // pred_region
        %p672 = scmp.lt.s32.totalorder %s15, 1
        %s673 = scalar_select %p672, %s15, 1
        %s674 = smul.addr %s673, 2
        %s675 = smul.addr %s674, 8
        %s676 = scalar_lea.vmem %s3, %s675
      $region44: #{tpu_custom_call.1} parent=39 // pred_fallthru
        _
    $region40: #{tpu_custom_call.1} parent=5 // pred_fallthru
      _
  $region6: #{tpu_custom_call.1} parent=0 // loop_footer
    %s13 = sadd.s32 1, %s9
  $region7: #{tpu_custom_call.1} parent=0 // loop_footer_branch
    %8 = sbr.rel target = $region3
  $region8: #{tpu_custom_call.1} parent=0 // loop_exit
    _

</llo_original>
